<compile_context>
chip_gen: v5e
topology: v5e:2x2
jax: 0.10.0
libtpu: 0.0.40
codegen_flags: <defaults>
</compile_context>

<pallas_src>
import jax
import jax.numpy as jnp
from jax.experimental import pallas as pl
from jax.experimental.pallas import tpu as pltpu


def _dma_copy_kernel(x_hbm_ref, o_hbm_ref, sem):
    # Single whole-buffer HBM -> HBM DMA.  No grid, no VMEM staging, no
    # padding/alignment requirements; src and dst have identical layouts.
    copy = pltpu.make_async_copy(x_hbm_ref, o_hbm_ref, sem)
    copy.start()
    copy.wait()


@jax.jit
def _pallas_identity(x):
    """Pass x through a Pallas HBM->HBM DMA copy (shape/dtype/values kept)."""
    if x.size == 0 or x.ndim == 0:
        # Degenerate shapes: nothing to DMA; identity is exact.
        return x
    itemsize = jnp.dtype(x.dtype).itemsize
    return pl.pallas_call(
        _dma_copy_kernel,
        out_shape=jax.ShapeDtypeStruct(x.shape, x.dtype),
        in_specs=[pl.BlockSpec(memory_space=pl.ANY)],   # leave input in HBM
        out_specs=pl.BlockSpec(memory_space=pl.ANY),    # allocate output in HBM
        scratch_shapes=[pltpu.SemaphoreType.DMA],
        cost_estimate=pl.CostEstimate(
            flops=0,
            transcendentals=0,
            bytes_accessed=2 * x.size * itemsize,       # pure-bandwidth op
        ),
    )(x)


class PrintShape:
    """JAX/Pallas equivalent of the PyTorch PrintShape nn.Module."""

    def __init__(self, name: str = '', min_kernel_bytes: int = 1 << 16):
        # min_kernel_bytes: tensors smaller than this skip the kernel and are
        # returned as-is (true identity); set to 0 to always run the kernel.
        self.name = name
        self.min_kernel_bytes = min_kernel_bytes

    def __call__(self, x):
        # Debug side effect: shapes are static, so a host-side print matches
        # PyTorch eager semantics.
        print(f'{self.name}: {x.shape}')
        nbytes = x.size * jnp.dtype(x.dtype).itemsize
        if x.size == 0 or x.ndim == 0 or nbytes < self.min_kernel_bytes:
            # Small / degenerate tensors: pallas_call launch overhead would
            # dominate a sub-microsecond copy; the identity is exact anyway.
            return x
        return _pallas_identity(x)


if __name__ == "__main__":
    key = jax.random.PRNGKey(0)
    k_main, k_ragged, k_bf16 = jax.random.split(key, 3)

    # Small NCHW-like input, typical place PrintShape is inserted for debugging.
    x = jax.random.normal(k_main, (2, 4, 16, 16), dtype=jnp.float32)

    # 1) Default module: small debug activation takes the zero-cost fast path.
    ps = PrintShape(name="debug_tensor")
    y = ps(x)
    jax.block_until_ready(y)
    assert y.shape == x.shape and y.dtype == x.dtype
    assert bool(jnp.all(y == x))

    # 2) Force the Pallas DMA kernel path on the same input.
    ps_kernel = PrintShape(name="debug_tensor_kernel", min_kernel_bytes=0)
    y2 = ps_kernel(x)
    jax.block_until_ready(y2)
    assert y2.shape == x.shape and y2.dtype == x.dtype
    assert bool(jnp.all(y2 == x))

    # 3) Ragged (non-128-aligned) shape: the DMA path needs no padding,
    #    reshaping, or lane alignment.
    x_ragged = jax.random.normal(k_ragged, (3, 5, 7), dtype=jnp.float32)
    y3 = ps_kernel(x_ragged)
    jax.block_until_ready(y3)
    assert y3.shape == x_ragged.shape and y3.dtype == x_ragged.dtype
    assert bool(jnp.all(y3 == x_ragged))

    # 4) Narrower dtype: bit-exact pass-through for bf16 as well.
    x_bf16 = jax.random.normal(k_bf16, (2, 4, 16, 16), dtype=jnp.bfloat16)
    y4 = ps_kernel(x_bf16)
    jax.block_until_ready(y4)
    assert y4.shape == x_bf16.shape and y4.dtype == jnp.bfloat16
    assert bool(jnp.all(y4 == x_bf16))

    print("KERNEL_OK")
</pallas_src>

<mosaic_0001>
module attributes {stable_mosaic.version = 11 : i64} {
  func.func @_dma_copy_kernel(%arg0: memref<2x4x16x16xf32, #tpu.memory_space<any>>, %arg1: memref<2x4x16x16xf32, #tpu.memory_space<any>>, %arg2: memref<!tpu.dma_semaphore, #tpu.memory_space<semaphore_mem>>) attributes {dimension_semantics = [], scalar_prefetch = 0 : i64, scratch_operands = 1 : i64, tpu.core_type = #tpu.core_type<tc>} {
    tpu.enqueue_dma source(%arg0 : memref<2x4x16x16xf32, #tpu.memory_space<any>>) target(%arg1 : memref<2x4x16x16xf32, #tpu.memory_space<any>>) target_semaphore(%arg2 : memref<!tpu.dma_semaphore, #tpu.memory_space<semaphore_mem>>)
    tpu.wait_dma2 semaphore(%arg2 : memref<!tpu.dma_semaphore, #tpu.memory_space<semaphore_mem>>) src(%arg0 : memref<2x4x16x16xf32, #tpu.memory_space<any>>) dst(%arg1 : memref<2x4x16x16xf32, #tpu.memory_space<any>>)
    return
  }
}

</mosaic_0001>

<llo_original>
// kernel: _pallas_identity.1
$region0: #{_pallas_identity.1}
  #allocation0 [shape = 'u32[]', space=smem, size = 0x4, offset = 0x4, fixed_abs, tag = 'smem constant byte address 0x4 - core index']
  #allocation1 [shape = 'u32[72,128]{1,0:T(1,128)}', space=vmem, size = 0x9000, scoped, tag = 'internal scratch']
  #allocation2 [shape = 's32[1]{0}', space=sflag, size = 0x4, scoped, tag = 'scratch operand']
  #allocation3 [shape = 's32[]', space=sflag, size = 0x4, offset = 0, fixed_abs, tag = 'sflag constant byte address 0x0 - dummy sync flag']
  #allocation4 [shape = 'u32[0]{0}', space=smem, size = 0, offset = 0, fixed_abs, tag = 'smem constant byte address 0x0 - null']
  %s0 = inlined_call_operand.hbm [shape: f32[2,4,16,16], index: 0, kind: input, shape index: {}]
  %s1 = inlined_call_operand.hbm [shape: f32[2,4,16,16], index: 1, kind: output, shape index: {}]
  %s2 = sld [smem:[#allocation0]]
  $region2: #{_pallas_identity.1} parent=0
    _
  %s4 = ssub.s32 1, %s2
  %s5 = scalar_select 0, %s4, %s2
  %s7 = sshll.u32 1, 14
  %s8 = sxor.u32 4294967295, %s7
  %s10 = sshll.u32 %s0, 4
  %s11 = int_to_ptr.hbm [resolvable:$true] %s10
  %s12 = sshll.u32 %s1, 4
  %s13 = int_to_ptr.hbm [resolvable:$true] %s12
  %16 = dma.general %s11, 2048, %s13, [#allocation2], [#allocation3], [#allocation4], 0, 0
  %s17 = smul.u32 2, 4
  %s18 = smul.u32 %s17, 16
  %s19 = smul.u32 %s18, 1
  %s20 = sshll.u32 %s19, 4
  %21 = dma.done [#allocation2], %s20
  %22 = vsyncmov [#allocation2]
  %s23 = vpop.sfrf %22
  %p24 = scmp.eq.s32.totalorder %s23, 0
  %p25 = pneg %p24
  %27 = shalt.err (%p25)

</llo_original>
